<compile_context>
chip_gen: v6e
topology: v6e:2x2x1
jax: 0.10.0
libtpu: 0.0.40
codegen_flags: <defaults>
</compile_context>

<pallas_src>
import jax
import jax.numpy as jnp
from jax import lax
from jax.experimental import pallas as pl
from jax.experimental.pallas import tpu as pltpu

# ---- static module hyper-parameters (match the PyTorch defaults) -----------
B, C, H, W = 2, 2, 16, 16        # small synthetic shapes
HW = H * W
BUDGET = 8                       # budget (ctor arg)
SLOPE = 2.0                      # self.slope (use_softplus=False path)
NEG_SLOPE = 0.2                  # LeakyReLU slope of the sampler stand-in
HIDDEN = 32                      # sampler stand-in hidden width
F_PAD = 40                       # 32 hidden + 1 constant (bias) feature, padded to 8n
CHUNK = 8                        # candidate draws per rejection-loop iteration
NUM_ROUNDS = 128                 # 128 * 8 = 1024 draws ~= torch's 1000-try budget


def _mix32(v):
    """Murmur3-style integer finalizer on int32 lanes (logical shifts via mask)."""
    v = v * jnp.int32(-1640531527)               # 0x9E3779B9: decorrelate sequential counters
    v = v ^ ((v >> 16) & jnp.int32(0x0000FFFF))
    v = v * jnp.int32(-2048144789)               # 0x85EBCA6B
    v = v ^ ((v >> 13) & jnp.int32(0x0007FFFF))
    v = v * jnp.int32(-1028477387)               # 0xC2B2AE35
    v = v ^ ((v >> 16) & jnp.int32(0x0000FFFF))
    return v


def policy_kernel(x_ref, m_ref, p_ref, seed_ref, bin_ref, prob_ref, found_ref):
    # x_ref: (B, 2, HW)  m_ref: (B, HW)  p_ref: (1, F_PAD, 4)  seed_ref: (1, 1)
    # bin_ref / prob_ref: (B, HW) outputs     found_ref: (B, 1) VMEM scratch
    bn, hw = bin_ref.shape

    # ---- sampler stand-in: 1x1 conv (2 -> 32) + LeakyReLU + 1x1 conv (32 -> 1)
    # packed params columns: [w1_c0, w1_c1, b1, w2]; row HIDDEN is the constant
    # feature (pre-activation 1.0) whose output weight carries the bias b2.
    x = x_ref[...].astype(jnp.float32)                       # (B, 2, HW)
    p = p_ref[...]                                           # (1, F_PAD, 4)
    w1_0 = p[:, :, 0:1]
    w1_1 = p[:, :, 1:2]
    b1 = p[:, :, 2:3]
    w2 = p[:, :, 3:4]
    h = b1 + w1_0 * x[:, 0:1, :] + w1_1 * x[:, 1:2, :]       # (B, F_PAD, HW)
    h = jnp.where(h > 0.0, h, jnp.float32(NEG_SLOPE) * h)    # LeakyReLU
    sampler_out = jnp.sum(w2 * h, axis=1)                    # (B, HW)  -- VPU/XLU only

    # ---- prob mask: sigmoid(slope * out) * ~mask   (use_softplus=False path)
    mask = m_ref[...]                                        # 0/1, 1 == already acquired
    inv = 1.0 - mask
    prob = inv / (1.0 + jnp.exp(-jnp.float32(SLOPE) * sampler_out))

    # ---- rescale_probs over the mask==0 positions, per batch row
    n_zero = jnp.sum(inv, axis=-1, keepdims=True)            # (B, 1)
    n_safe = jnp.maximum(n_zero, 1.0)                        # guard (torch would raise later)
    sum_p = jnp.sum(prob, axis=-1, keepdims=True)
    xbar = sum_p / n_safe
    sparsity = jnp.float32(BUDGET) / n_safe
    r = sparsity / jnp.maximum(xbar, 1e-12)
    beta = (1.0 - sparsity) / jnp.maximum(1.0 - xbar, 1e-12)
    rescaled = jnp.where(r <= 1.0, prob * r, 1.0 - (1.0 - prob) * beta)
    prob_mask = jnp.where(mask == 0.0, rescaled, 0.0)
    prob_ref[...] = prob_mask

    # ---- ThresholdSigmoidMask2D.forward: stochastic binarization with
    #      rejection sampling on isclose(mean(result), mean(prob_mask), atol=1e-3).
    # Count-domain acceptance: |count - sum(prob)| <= HW*atol + rtol*|sum(prob)|.
    target = jnp.sum(prob_mask, axis=-1, keepdims=True)      # (B, 1)
    tol = jnp.float32(hw * 1e-3) + jnp.float32(1e-5) * jnp.abs(target)
    tgt3 = target[:, :, None]                                # (B, 1, 1)
    tol3 = tol[:, :, None]                                   # (B, 1, 1)
    # threshold pre-scaled to the 24-bit integer domain of the hashed uniforms
    thr3 = prob_mask[:, None, :] * jnp.float32(1 << 24)      # (B, 1, HW)

    # per-element counters, constant across rounds (hoisted out of the loop)
    lane = lax.broadcasted_iota(jnp.int32, (bn, CHUNK, hw), 2)
    cand = lax.broadcasted_iota(jnp.int32, (bn, CHUNK, hw), 1)
    row = lax.broadcasted_iota(jnp.int32, (bn, CHUNK, hw), 0)
    seed = seed_ref[...].reshape(1, 1, 1).astype(jnp.int32)
    base_ctr = (row * CHUNK + cand) * hw + lane + seed       # (B, CHUNK, HW) int32
    block = jnp.int32(bn * CHUNK * hw)

    found_ref[...] = jnp.zeros_like(found_ref)
    bin_ref[...] = jnp.zeros_like(bin_ref)

    def body(carry):
        it, _ = carry
        bits = _mix32(base_ctr + it * block)
        ubits = ((bits >> 8) & jnp.int32(0x00FFFFFF)).astype(jnp.float32)  # uniform in [0, 2^24)
        res = (ubits < thr3).astype(jnp.float32)             # (B, CHUNK, HW) candidate masks
        counts = jnp.sum(res, axis=-1, keepdims=True)        # (B, CHUNK, 1)
        ok = (jnp.abs(counts - tgt3) <= tol3).astype(jnp.float32)
        found = found_ref[...]                               # (B, 1)
        result = bin_ref[...]                                # (B, HW)
        # pick the first accepted candidate per row; track the latest draw until then
        for c in range(CHUNK):                               # statically unrolled
            result = jnp.where(found > 0.5, result, res[:, c, :])
            found = jnp.maximum(found, ok[:, c, :])
        bin_ref[...] = result
        found_ref[...] = found
        done = (jnp.sum(found) >= jnp.float32(bn)).astype(jnp.int32)
        return it + jnp.int32(1), done

    def cond(carry):
        it, done = carry
        return jnp.logical_and(it < NUM_ROUNDS, done == 0)

    # TODO(synk): PyTorch raises RuntimeError when the try budget is exhausted;
    # here rows that never accept keep their final candidate draw instead.
    lax.while_loop(cond, body, (jnp.int32(0), jnp.int32(0)))


def pack_sampler_params(w1, b1, w2, b2):
    """Pack the 2->32->1 MLP weights into one (1, F_PAD, 4) block."""
    p = jnp.zeros((1, F_PAD, 4), jnp.float32)
    p = p.at[0, :HIDDEN, 0].set(w1[0])        # conv1 weights, input channel 0
    p = p.at[0, :HIDDEN, 1].set(w1[1])        # conv1 weights, input channel 1
    p = p.at[0, :HIDDEN, 2].set(b1)           # conv1 bias
    p = p.at[0, :HIDDEN, 3].set(w2[:, 0])     # conv2 weights
    p = p.at[0, HIDDEN, 2].set(1.0)           # constant feature (pre-activation 1 > 0)
    p = p.at[0, HIDDEN, 3].set(b2[0])         # its output weight == conv2 bias
    return p


def straight_through_policy_2d(kspace_pred, mask, params, seed):
    """kspace_pred: (B, 2, H, W) f32; mask: (B, H, W) 0/1 f32; seed: (1, 1) int32."""
    bn, cn, hn, wn = kspace_pred.shape
    hw = hn * wn
    x = kspace_pred.reshape(bn, cn, hw).astype(jnp.float32)
    m = mask.reshape(bn, hw).astype(jnp.float32)
    seed = seed.reshape(1, 1).astype(jnp.int32)

    bin_flat, prob_flat = pl.pallas_call(
        policy_kernel,
        out_shape=(jax.ShapeDtypeStruct((bn, hw), jnp.float32),
                   jax.ShapeDtypeStruct((bn, hw), jnp.float32)),
        scratch_shapes=[pltpu.VMEM((bn, 1), jnp.float32)],
    )(x, m, params, seed)
    return bin_flat.reshape(bn, hn, wn), prob_flat.reshape(bn, hn, wn)


if __name__ == "__main__":
    key = jax.random.PRNGKey(0)
    k1, k2, k3, k4, k5, k6 = jax.random.split(key, 6)

    # deterministic sampler stand-in parameters
    w1 = jax.random.normal(k1, (C, HIDDEN), jnp.float32) / jnp.sqrt(float(C))
    b1 = jax.random.normal(k2, (HIDDEN,), jnp.float32) * 0.1
    w2 = jax.random.normal(k3, (HIDDEN, 1), jnp.float32) / jnp.sqrt(float(HIDDEN))
    b2 = jax.random.normal(k4, (1,), jnp.float32) * 0.1
    params = pack_sampler_params(w1, b1, w2, b2)

    # inputs
    kspace_pred = jax.random.normal(k5, (B, C, H, W), jnp.float32)
    # column sub-sampling mask (equal zero-count per batch, as the torch code requires)
    col_mask = (jnp.arange(W) % 4 == 0).astype(jnp.float32)
    mask = jnp.broadcast_to(col_mask[None, None, :], (B, H, W))
    # runtime seed -> the binarizer stays stochastic per call
    seed = jax.random.randint(k6, (1, 1), 0, jnp.iinfo(jnp.int32).max, dtype=jnp.int32)

    fn = jax.jit(straight_through_policy_2d)
    bin_mask, prob_mask = fn(kspace_pred, mask, params, seed)
    jax.block_until_ready((bin_mask, prob_mask))

    assert bin_mask.shape == (B, H, W) and prob_mask.shape == (B, H, W)
    assert bool(jnp.all(jnp.isfinite(prob_mask))) and bool(jnp.all(jnp.isfinite(bin_mask)))
    print("KERNEL_OK")
</pallas_src>

<mosaic_0001>
module attributes {stable_mosaic.version = 11 : i64} {
  func.func @policy_kernel(%arg0: memref<2x2x256xf32, #tpu.memory_space<vmem>>, %arg1: memref<2x256xf32, #tpu.memory_space<vmem>>, %arg2: memref<1x40x4xf32, #tpu.memory_space<vmem>>, %arg3: memref<1x1xi32, #tpu.memory_space<vmem>>, %arg4: memref<2x256xf32, #tpu.memory_space<vmem>>, %arg5: memref<2x256xf32, #tpu.memory_space<vmem>>, %arg6: memref<2x1xf32, #tpu.memory_space<vmem>>) attributes {dimension_semantics = [], scalar_prefetch = 0 : i64, scratch_operands = 1 : i64, tpu.core_type = #tpu.core_type<tc>} {
    %c0 = arith.constant 0 : index
    %c0_0 = arith.constant 0 : index
    %c0_1 = arith.constant 0 : index
    %0 = vector.load %arg0[%c0, %c0_0, %c0_1] : memref<2x2x256xf32, #tpu.memory_space<vmem>>, vector<2x2x256xf32>
    %c0_2 = arith.constant 0 : index
    %c0_3 = arith.constant 0 : index
    %c0_4 = arith.constant 0 : index
    %1 = vector.load %arg2[%c0_2, %c0_3, %c0_4] : memref<1x40x4xf32, #tpu.memory_space<vmem>>, vector<1x40x4xf32>
    %2 = vector.extract_strided_slice %1 {offsets = [0, 0, 0], sizes = [1, 40, 1], strides = [1, 1, 1]} : vector<1x40x4xf32> to vector<1x40x1xf32>
    %3 = vector.extract_strided_slice %1 {offsets = [0, 0, 1], sizes = [1, 40, 1], strides = [1, 1, 1]} : vector<1x40x4xf32> to vector<1x40x1xf32>
    %4 = vector.extract_strided_slice %1 {offsets = [0, 0, 2], sizes = [1, 40, 1], strides = [1, 1, 1]} : vector<1x40x4xf32> to vector<1x40x1xf32>
    %5 = vector.extract_strided_slice %1 {offsets = [0, 0, 3], sizes = [1, 40, 1], strides = [1, 1, 1]} : vector<1x40x4xf32> to vector<1x40x1xf32>
    %6 = vector.extract_strided_slice %0 {offsets = [0, 0, 0], sizes = [2, 1, 256], strides = [1, 1, 1]} : vector<2x2x256xf32> to vector<2x1x256xf32>
    %7 = vector.broadcast %2 : vector<1x40x1xf32> to vector<2x40x256xf32>
    %8 = vector.broadcast %6 : vector<2x1x256xf32> to vector<2x40x256xf32>
    %9 = arith.mulf %7, %8 : vector<2x40x256xf32>
    %10 = vector.broadcast %4 : vector<1x40x1xf32> to vector<2x40x256xf32>
    %11 = arith.addf %10, %9 : vector<2x40x256xf32>
    %12 = vector.extract_strided_slice %0 {offsets = [0, 1, 0], sizes = [2, 1, 256], strides = [1, 1, 1]} : vector<2x2x256xf32> to vector<2x1x256xf32>
    %13 = vector.broadcast %3 : vector<1x40x1xf32> to vector<2x40x256xf32>
    %14 = vector.broadcast %12 : vector<2x1x256xf32> to vector<2x40x256xf32>
    %15 = arith.mulf %13, %14 : vector<2x40x256xf32>
    %16 = arith.addf %11, %15 : vector<2x40x256xf32>
    %cst = arith.constant 0.000000e+00 : f32
    %17 = vector.broadcast %cst : f32 to vector<2x40x256xf32>
    %18 = arith.cmpf ogt, %16, %17 : vector<2x40x256xf32>
    %cst_5 = arith.constant 2.000000e-01 : f32
    %19 = vector.broadcast %cst_5 : f32 to vector<2x40x256xf32>
    %20 = arith.mulf %19, %16 : vector<2x40x256xf32>
    %21 = arith.select %18, %16, %20 : vector<2x40x256xi1>, vector<2x40x256xf32>
    %22 = vector.broadcast %5 : vector<1x40x1xf32> to vector<2x40x256xf32>
    %23 = arith.mulf %22, %21 : vector<2x40x256xf32>
    %cst_6 = arith.constant dense<0.000000e+00> : vector<2x256xf32>
    %24 = vector.multi_reduction <add>, %23, %cst_6 [1] : vector<2x40x256xf32> to vector<2x256xf32>
    %c0_7 = arith.constant 0 : index
    %c0_8 = arith.constant 0 : index
    %25 = vector.load %arg1[%c0_7, %c0_8] : memref<2x256xf32, #tpu.memory_space<vmem>>, vector<2x256xf32>
    %cst_9 = arith.constant 1.000000e+00 : f32
    %26 = vector.broadcast %cst_9 : f32 to vector<2x256xf32>
    %27 = arith.subf %26, %25 : vector<2x256xf32>
    %cst_10 = arith.constant 0.000000e+00 : f32
    %cst_11 = arith.constant 2.000000e+00 : f32
    %28 = arith.subf %cst_10, %cst_11 : f32
    %29 = vector.broadcast %28 : f32 to vector<2x256xf32>
    %30 = arith.mulf %29, %24 : vector<2x256xf32>
    %31 = math.exp %30 : vector<2x256xf32>
    %cst_12 = arith.constant 1.000000e+00 : f32
    %32 = vector.broadcast %cst_12 : f32 to vector<2x256xf32>
    %33 = arith.addf %32, %31 : vector<2x256xf32>
    %34 = arith.divf %27, %33 : vector<2x256xf32>
    %cst_13 = arith.constant dense<0.000000e+00> : vector<2xf32>
    %35 = vector.multi_reduction <add>, %27, %cst_13 [1] : vector<2x256xf32> to vector<2xf32>
    %36 = vector.shape_cast %35 : vector<2xf32> to vector<2x1xf32>
    %cst_14 = arith.constant 1.000000e+00 : f32
    %37 = vector.broadcast %cst_14 : f32 to vector<2x1xf32>
    %38 = arith.maximumf %36, %37 : vector<2x1xf32>
    %cst_15 = arith.constant dense<0.000000e+00> : vector<2xf32>
    %39 = vector.multi_reduction <add>, %34, %cst_15 [1] : vector<2x256xf32> to vector<2xf32>
    %40 = vector.shape_cast %39 : vector<2xf32> to vector<2x1xf32>
    %41 = arith.divf %40, %38 : vector<2x1xf32>
    %cst_16 = arith.constant 8.000000e+00 : f32
    %42 = vector.broadcast %cst_16 : f32 to vector<2x1xf32>
    %43 = arith.divf %42, %38 : vector<2x1xf32>
    %cst_17 = arith.constant 9.99999996E-13 : f32
    %44 = vector.broadcast %cst_17 : f32 to vector<2x1xf32>
    %45 = arith.maximumf %41, %44 : vector<2x1xf32>
    %46 = arith.divf %43, %45 : vector<2x1xf32>
    %cst_18 = arith.constant 1.000000e+00 : f32
    %47 = vector.broadcast %cst_18 : f32 to vector<2x1xf32>
    %48 = arith.subf %47, %43 : vector<2x1xf32>
    %cst_19 = arith.constant 1.000000e+00 : f32
    %49 = vector.broadcast %cst_19 : f32 to vector<2x1xf32>
    %50 = arith.subf %49, %41 : vector<2x1xf32>
    %cst_20 = arith.constant 9.99999996E-13 : f32
    %51 = vector.broadcast %cst_20 : f32 to vector<2x1xf32>
    %52 = arith.maximumf %50, %51 : vector<2x1xf32>
    %53 = arith.divf %48, %52 : vector<2x1xf32>
    %cst_21 = arith.constant 1.000000e+00 : f32
    %54 = vector.broadcast %cst_21 : f32 to vector<2x1xf32>
    %55 = arith.cmpf ole, %46, %54 : vector<2x1xf32>
    %56 = vector.broadcast %46 : vector<2x1xf32> to vector<2x256xf32>
    %57 = arith.mulf %34, %56 : vector<2x256xf32>
    %cst_22 = arith.constant 1.000000e+00 : f32
    %58 = vector.broadcast %cst_22 : f32 to vector<2x256xf32>
    %59 = arith.subf %58, %34 : vector<2x256xf32>
    %60 = vector.broadcast %53 : vector<2x1xf32> to vector<2x256xf32>
    %61 = arith.mulf %59, %60 : vector<2x256xf32>
    %cst_23 = arith.constant 1.000000e+00 : f32
    %62 = vector.broadcast %cst_23 : f32 to vector<2x256xf32>
    %63 = arith.subf %62, %61 : vector<2x256xf32>
    %64 = vector.shape_cast %55 : vector<2x1xi1> to vector<2x1xi1>
    %65 = vector.broadcast %64 : vector<2x1xi1> to vector<2x256xi1>
    %66 = arith.select %65, %57, %63 : vector<2x256xi1>, vector<2x256xf32>
    %cst_24 = arith.constant 0.000000e+00 : f32
    %67 = vector.broadcast %cst_24 : f32 to vector<2x256xf32>
    %68 = arith.cmpf oeq, %25, %67 : vector<2x256xf32>
    %cst_25 = arith.constant 0.000000e+00 : f32
    %69 = vector.broadcast %cst_25 : f32 to vector<2x256xf32>
    %70 = arith.select %68, %66, %69 : vector<2x256xi1>, vector<2x256xf32>
    %c0_26 = arith.constant 0 : index
    %c0_27 = arith.constant 0 : index
    %71 = vector.load %arg5[%c0_26, %c0_27] : memref<2x256xf32, #tpu.memory_space<vmem>>, vector<2x256xf32>
    tpu.vector_store %arg5[%c0_26, %c0_27], %70 {strides = array<i32>} : memref<2x256xf32, #tpu.memory_space<vmem>>, vector<2x256xf32>,
    %cst_28 = arith.constant dense<0.000000e+00> : vector<2xf32>
    %72 = vector.multi_reduction <add>, %70, %cst_28 [1] : vector<2x256xf32> to vector<2xf32>
    %73 = vector.shape_cast %72 : vector<2xf32> to vector<2x1xf32>
    %74 = math.absf %73 : vector<2x1xf32>
    %cst_29 = arith.constant 9.99999974E-6 : f32
    %75 = vector.broadcast %cst_29 : f32 to vector<2x1xf32>
    %76 = arith.mulf %75, %74 : vector<2x1xf32>
    %cst_30 = arith.constant 2.560000e-01 : f32
    %77 = vector.broadcast %cst_30 : f32 to vector<2x1xf32>
    %78 = arith.addf %77, %76 : vector<2x1xf32>
    %79 = vector.shape_cast %73 : vector<2x1xf32> to vector<2x1x1xf32>
    %80 = vector.shape_cast %78 : vector<2x1xf32> to vector<2x1x1xf32>
    %81 = vector.shape_cast %70 : vector<2x256xf32> to vector<2x1x256xf32>
    %cst_31 = arith.constant 0x4B800000 : f32
    %82 = vector.broadcast %cst_31 : f32 to vector<2x1x256xf32>
    %83 = arith.mulf %81, %82 : vector<2x1x256xf32>
    %84 = tpu.iota {dimensions = array<i32: 2>} : vector<2x8x256xi32>
    %85 = tpu.iota {dimensions = array<i32: 1>} : vector<2x8x256xi32>
    %86 = tpu.iota {dimensions = array<i32: 0>} : vector<2x8x256xi32>
    %c0_32 = arith.constant 0 : index
    %c0_33 = arith.constant 0 : index
    %87 = vector.load %arg3[%c0_32, %c0_33] : memref<1x1xi32, #tpu.memory_space<vmem>>, vector<1x1xi32>
    %88 = vector.shape_cast %87 : vector<1x1xi32> to vector<1x1x1xi32>
    %c8_i32 = arith.constant 8 : i32
    %89 = vector.broadcast %c8_i32 : i32 to vector<2x8x256xi32>
    %90 = arith.muli %86, %89 : vector<2x8x256xi32>
    %91 = arith.addi %90, %85 : vector<2x8x256xi32>
    %c256_i32 = arith.constant 256 : i32
    %92 = vector.broadcast %c256_i32 : i32 to vector<2x8x256xi32>
    %93 = arith.muli %91, %92 : vector<2x8x256xi32>
    %94 = arith.addi %93, %84 : vector<2x8x256xi32>
    %95 = vector.broadcast %88 : vector<1x1x1xi32> to vector<2x8x256xi32>
    %96 = arith.addi %94, %95 : vector<2x8x256xi32>
    %cst_34 = arith.constant 0.000000e+00 : f32
    %97 = vector.broadcast %cst_34 : f32 to vector<2x1xf32>
    %c0_35 = arith.constant 0 : index
    %c0_36 = arith.constant 0 : index
    %98 = vector.load %arg6[%c0_35, %c0_36] : memref<2x1xf32, #tpu.memory_space<vmem>>, vector<2x1xf32>
    tpu.vector_store %arg6[%c0_35, %c0_36], %97 {strides = array<i32>} : memref<2x1xf32, #tpu.memory_space<vmem>>, vector<2x1xf32>,
    %cst_37 = arith.constant 0.000000e+00 : f32
    %99 = vector.broadcast %cst_37 : f32 to vector<2x256xf32>
    %c0_38 = arith.constant 0 : index
    %c0_39 = arith.constant 0 : index
    %100 = vector.load %arg4[%c0_38, %c0_39] : memref<2x256xf32, #tpu.memory_space<vmem>>, vector<2x256xf32>
    tpu.vector_store %arg4[%c0_38, %c0_39], %99 {strides = array<i32>} : memref<2x256xf32, #tpu.memory_space<vmem>>, vector<2x256xf32>,
    %c4096_i32 = arith.constant 4096 : i32
    %c0_i32 = arith.constant 0 : i32
    %c0_i32_40 = arith.constant 0 : i32
    %101:2 = scf.while (%arg7 = %c0_i32, %arg8 = %c0_i32_40) : (i32, i32) -> (i32, i32) {
      %c128_i32 = arith.constant 128 : i32
      %102 = arith.cmpi slt, %arg7, %c128_i32 : i32
      %c0_i32_41 = arith.constant 0 : i32
      %103 = arith.cmpi eq, %arg8, %c0_i32_41 : i32
      %104 = arith.andi %102, %103 : i1
      scf.condition(%104) %arg7, %arg8 : i32, i32
    } do {
    ^bb0(%arg7: i32, %arg8: i32):
      %102 = arith.muli %arg7, %c4096_i32 : i32
      %103 = vector.broadcast %102 : i32 to vector<2x8x256xi32>
      %104 = arith.addi %96, %103 : vector<2x8x256xi32>
      %c-1640531527_i32 = arith.constant -1640531527 : i32
      %105 = vector.broadcast %c-1640531527_i32 : i32 to vector<2x8x256xi32>
      %106 = arith.muli %104, %105 : vector<2x8x256xi32>
      %c16_i32 = arith.constant 16 : i32
      %107 = vector.broadcast %c16_i32 : i32 to vector<2x8x256xi32>
      %108 = arith.shrsi %106, %107 : vector<2x8x256xi32>
      %c65535_i32 = arith.constant 65535 : i32
      %109 = vector.broadcast %c65535_i32 : i32 to vector<2x8x256xi32>
      %110 = arith.andi %108, %109 : vector<2x8x256xi32>
      %111 = arith.xori %106, %110 : vector<2x8x256xi32>
      %c-2048144789_i32 = arith.constant -2048144789 : i32
      %112 = vector.broadcast %c-2048144789_i32 : i32 to vector<2x8x256xi32>
      %113 = arith.muli %111, %112 : vector<2x8x256xi32>
      %c13_i32 = arith.constant 13 : i32
      %114 = vector.broadcast %c13_i32 : i32 to vector<2x8x256xi32>
      %115 = arith.shrsi %113, %114 : vector<2x8x256xi32>
      %c524287_i32 = arith.constant 524287 : i32
      %116 = vector.broadcast %c524287_i32 : i32 to vector<2x8x256xi32>
      %117 = arith.andi %115, %116 : vector<2x8x256xi32>
      %118 = arith.xori %113, %117 : vector<2x8x256xi32>
      %c-1028477387_i32 = arith.constant -1028477387 : i32
      %119 = vector.broadcast %c-1028477387_i32 : i32 to vector<2x8x256xi32>
      %120 = arith.muli %118, %119 : vector<2x8x256xi32>
      %c16_i32_41 = arith.constant 16 : i32
      %121 = vector.broadcast %c16_i32_41 : i32 to vector<2x8x256xi32>
      %122 = arith.shrsi %120, %121 : vector<2x8x256xi32>
      %c65535_i32_42 = arith.constant 65535 : i32
      %123 = vector.broadcast %c65535_i32_42 : i32 to vector<2x8x256xi32>
      %124 = arith.andi %122, %123 : vector<2x8x256xi32>
      %125 = arith.xori %120, %124 : vector<2x8x256xi32>
      %c8_i32_43 = arith.constant 8 : i32
      %126 = vector.broadcast %c8_i32_43 : i32 to vector<2x8x256xi32>
      %127 = arith.shrsi %125, %126 : vector<2x8x256xi32>
      %c16777215_i32 = arith.constant 16777215 : i32
      %128 = vector.broadcast %c16777215_i32 : i32 to vector<2x8x256xi32>
      %129 = arith.andi %127, %128 : vector<2x8x256xi32>
      %130 = arith.sitofp %129 : vector<2x8x256xi32> to vector<2x8x256xf32>
      %131 = vector.broadcast %83 : vector<2x1x256xf32> to vector<2x8x256xf32>
      %132 = arith.cmpf olt, %130, %131 : vector<2x8x256xf32>
      %133 = arith.extui %132 : vector<2x8x256xi1> to vector<2x8x256xi32>
      %134 = arith.sitofp %133 : vector<2x8x256xi32> to vector<2x8x256xf32>
      %cst_44 = arith.constant dense<0.000000e+00> : vector<2x8xf32>
      %135 = vector.multi_reduction <add>, %134, %cst_44 [2] : vector<2x8x256xf32> to vector<2x8xf32>
      %136 = vector.shape_cast %135 : vector<2x8xf32> to vector<2x8x1xf32>
      %137 = vector.broadcast %79 : vector<2x1x1xf32> to vector<2x8x1xf32>
      %138 = arith.subf %136, %137 : vector<2x8x1xf32>
      %139 = math.absf %138 : vector<2x8x1xf32>
      %140 = vector.broadcast %80 : vector<2x1x1xf32> to vector<2x8x1xf32>
      %141 = arith.cmpf ole, %139, %140 : vector<2x8x1xf32>
      %142 = arith.extui %141 : vector<2x8x1xi1> to vector<2x8x1xi32>
      %143 = arith.sitofp %142 : vector<2x8x1xi32> to vector<2x8x1xf32>
      %c0_45 = arith.constant 0 : index
      %c0_46 = arith.constant 0 : index
      %144 = vector.load %arg6[%c0_45, %c0_46] : memref<2x1xf32, #tpu.memory_space<vmem>>, vector<2x1xf32>
      %c0_47 = arith.constant 0 : index
      %c0_48 = arith.constant 0 : index
      %145 = vector.load %arg4[%c0_47, %c0_48] : memref<2x256xf32, #tpu.memory_space<vmem>>, vector<2x256xf32>
      %cst_49 = arith.constant 5.000000e-01 : f32
      %146 = vector.broadcast %cst_49 : f32 to vector<2x1xf32>
      %147 = arith.cmpf ogt, %144, %146 : vector<2x1xf32>
      %148 = vector.extract_strided_slice %134 {offsets = [0, 0, 0], sizes = [2, 1, 256], strides = [1, 1, 1]} : vector<2x8x256xf32> to vector<2x1x256xf32>
      %149 = vector.shape_cast %148 : vector<2x1x256xf32> to vector<2x256xf32>
      %150 = vector.shape_cast %147 : vector<2x1xi1> to vector<2x1xi1>
      %151 = vector.broadcast %150 : vector<2x1xi1> to vector<2x256xi1>
      %152 = arith.select %151, %145, %149 : vector<2x256xi1>, vector<2x256xf32>
      %153 = vector.extract_strided_slice %143 {offsets = [0, 0, 0], sizes = [2, 1, 1], strides = [1, 1, 1]} : vector<2x8x1xf32> to vector<2x1x1xf32>
      %154 = vector.shape_cast %153 : vector<2x1x1xf32> to vector<2x1xf32>
      %155 = arith.maximumf %144, %154 : vector<2x1xf32>
      %cst_50 = arith.constant 5.000000e-01 : f32
      %156 = vector.broadcast %cst_50 : f32 to vector<2x1xf32>
      %157 = arith.cmpf ogt, %155, %156 : vector<2x1xf32>
      %158 = vector.extract_strided_slice %134 {offsets = [0, 1, 0], sizes = [2, 1, 256], strides = [1, 1, 1]} : vector<2x8x256xf32> to vector<2x1x256xf32>
      %159 = vector.shape_cast %158 : vector<2x1x256xf32> to vector<2x256xf32>
      %160 = vector.shape_cast %157 : vector<2x1xi1> to vector<2x1xi1>
      %161 = vector.broadcast %160 : vector<2x1xi1> to vector<2x256xi1>
      %162 = arith.select %161, %152, %159 : vector<2x256xi1>, vector<2x256xf32>
      %163 = vector.extract_strided_slice %143 {offsets = [0, 1, 0], sizes = [2, 1, 1], strides = [1, 1, 1]} : vector<2x8x1xf32> to vector<2x1x1xf32>
      %164 = vector.shape_cast %163 : vector<2x1x1xf32> to vector<2x1xf32>
      %165 = arith.maximumf %155, %164 : vector<2x1xf32>
      %cst_51 = arith.constant 5.000000e-01 : f32
      %166 = vector.broadcast %cst_51 : f32 to vector<2x1xf32>
      %167 = arith.cmpf ogt, %165, %166 : vector<2x1xf32>
      %168 = vector.extract_strided_slice %134 {offsets = [0, 2, 0], sizes = [2, 1, 256], strides = [1, 1, 1]} : vector<2x8x256xf32> to vector<2x1x256xf32>
      %169 = vector.shape_cast %168 : vector<2x1x256xf32> to vector<2x256xf32>
      %170 = vector.shape_cast %167 : vector<2x1xi1> to vector<2x1xi1>
      %171 = vector.broadcast %170 : vector<2x1xi1> to vector<2x256xi1>
      %172 = arith.select %171, %162, %169 : vector<2x256xi1>, vector<2x256xf32>
      %173 = vector.extract_strided_slice %143 {offsets = [0, 2, 0], sizes = [2, 1, 1], strides = [1, 1, 1]} : vector<2x8x1xf32> to vector<2x1x1xf32>
      %174 = vector.shape_cast %173 : vector<2x1x1xf32> to vector<2x1xf32>
      %175 = arith.maximumf %165, %174 : vector<2x1xf32>
      %cst_52 = arith.constant 5.000000e-01 : f32
      %176 = vector.broadcast %cst_52 : f32 to vector<2x1xf32>
      %177 = arith.cmpf ogt, %175, %176 : vector<2x1xf32>
      %178 = vector.extract_strided_slice %134 {offsets = [0, 3, 0], sizes = [2, 1, 256], strides = [1, 1, 1]} : vector<2x8x256xf32> to vector<2x1x256xf32>
      %179 = vector.shape_cast %178 : vector<2x1x256xf32> to vector<2x256xf32>
      %180 = vector.shape_cast %177 : vector<2x1xi1> to vector<2x1xi1>
      %181 = vector.broadcast %180 : vector<2x1xi1> to vector<2x256xi1>
      %182 = arith.select %181, %172, %179 : vector<2x256xi1>, vector<2x256xf32>
      %183 = vector.extract_strided_slice %143 {offsets = [0, 3, 0], sizes = [2, 1, 1], strides = [1, 1, 1]} : vector<2x8x1xf32> to vector<2x1x1xf32>
      %184 = vector.shape_cast %183 : vector<2x1x1xf32> to vector<2x1xf32>
      %185 = arith.maximumf %175, %184 : vector<2x1xf32>
      %cst_53 = arith.constant 5.000000e-01 : f32
      %186 = vector.broadcast %cst_53 : f32 to vector<2x1xf32>
      %187 = arith.cmpf ogt, %185, %186 : vector<2x1xf32>
      %188 = vector.extract_strided_slice %134 {offsets = [0, 4, 0], sizes = [2, 1, 256], strides = [1, 1, 1]} : vector<2x8x256xf32> to vector<2x1x256xf32>
      %189 = vector.shape_cast %188 : vector<2x1x256xf32> to vector<2x256xf32>
      %190 = vector.shape_cast %187 : vector<2x1xi1> to vector<2x1xi1>
      %191 = vector.broadcast %190 : vector<2x1xi1> to vector<2x256xi1>
      %192 = arith.select %191, %182, %189 : vector<2x256xi1>, vector<2x256xf32>
      %193 = vector.extract_strided_slice %143 {offsets = [0, 4, 0], sizes = [2, 1, 1], strides = [1, 1, 1]} : vector<2x8x1xf32> to vector<2x1x1xf32>
      %194 = vector.shape_cast %193 : vector<2x1x1xf32> to vector<2x1xf32>
      %195 = arith.maximumf %185, %194 : vector<2x1xf32>
      %cst_54 = arith.constant 5.000000e-01 : f32
      %196 = vector.broadcast %cst_54 : f32 to vector<2x1xf32>
      %197 = arith.cmpf ogt, %195, %196 : vector<2x1xf32>
      %198 = vector.extract_strided_slice %134 {offsets = [0, 5, 0], sizes = [2, 1, 256], strides = [1, 1, 1]} : vector<2x8x256xf32> to vector<2x1x256xf32>
      %199 = vector.shape_cast %198 : vector<2x1x256xf32> to vector<2x256xf32>
      %200 = vector.shape_cast %197 : vector<2x1xi1> to vector<2x1xi1>
      %201 = vector.broadcast %200 : vector<2x1xi1> to vector<2x256xi1>
      %202 = arith.select %201, %192, %199 : vector<2x256xi1>, vector<2x256xf32>
      %203 = vector.extract_strided_slice %143 {offsets = [0, 5, 0], sizes = [2, 1, 1], strides = [1, 1, 1]} : vector<2x8x1xf32> to vector<2x1x1xf32>
      %204 = vector.shape_cast %203 : vector<2x1x1xf32> to vector<2x1xf32>
      %205 = arith.maximumf %195, %204 : vector<2x1xf32>
      %cst_55 = arith.constant 5.000000e-01 : f32
      %206 = vector.broadcast %cst_55 : f32 to vector<2x1xf32>
      %207 = arith.cmpf ogt, %205, %206 : vector<2x1xf32>
      %208 = vector.extract_strided_slice %134 {offsets = [0, 6, 0], sizes = [2, 1, 256], strides = [1, 1, 1]} : vector<2x8x256xf32> to vector<2x1x256xf32>
      %209 = vector.shape_cast %208 : vector<2x1x256xf32> to vector<2x256xf32>
      %210 = vector.shape_cast %207 : vector<2x1xi1> to vector<2x1xi1>
      %211 = vector.broadcast %210 : vector<2x1xi1> to vector<2x256xi1>
      %212 = arith.select %211, %202, %209 : vector<2x256xi1>, vector<2x256xf32>
      %213 = vector.extract_strided_slice %143 {offsets = [0, 6, 0], sizes = [2, 1, 1], strides = [1, 1, 1]} : vector<2x8x1xf32> to vector<2x1x1xf32>
      %214 = vector.shape_cast %213 : vector<2x1x1xf32> to vector<2x1xf32>
      %215 = arith.maximumf %205, %214 : vector<2x1xf32>
      %cst_56 = arith.constant 5.000000e-01 : f32
      %216 = vector.broadcast %cst_56 : f32 to vector<2x1xf32>
      %217 = arith.cmpf ogt, %215, %216 : vector<2x1xf32>
      %218 = vector.extract_strided_slice %134 {offsets = [0, 7, 0], sizes = [2, 1, 256], strides = [1, 1, 1]} : vector<2x8x256xf32> to vector<2x1x256xf32>
      %219 = vector.shape_cast %218 : vector<2x1x256xf32> to vector<2x256xf32>
      %220 = vector.shape_cast %217 : vector<2x1xi1> to vector<2x1xi1>
      %221 = vector.broadcast %220 : vector<2x1xi1> to vector<2x256xi1>
      %222 = arith.select %221, %212, %219 : vector<2x256xi1>, vector<2x256xf32>
      %223 = vector.extract_strided_slice %143 {offsets = [0, 7, 0], sizes = [2, 1, 1], strides = [1, 1, 1]} : vector<2x8x1xf32> to vector<2x1x1xf32>
      %224 = vector.shape_cast %223 : vector<2x1x1xf32> to vector<2x1xf32>
      %225 = arith.maximumf %215, %224 : vector<2x1xf32>
      %c0_57 = arith.constant 0 : index
      %c0_58 = arith.constant 0 : index
      %226 = vector.load %arg4[%c0_57, %c0_58] : memref<2x256xf32, #tpu.memory_space<vmem>>, vector<2x256xf32>
      tpu.vector_store %arg4[%c0_57, %c0_58], %222 {strides = array<i32>} : memref<2x256xf32, #tpu.memory_space<vmem>>, vector<2x256xf32>,
      %c0_59 = arith.constant 0 : index
      %c0_60 = arith.constant 0 : index
      %227 = vector.load %arg6[%c0_59, %c0_60] : memref<2x1xf32, #tpu.memory_space<vmem>>, vector<2x1xf32>
      tpu.vector_store %arg6[%c0_59, %c0_60], %225 {strides = array<i32>} : memref<2x1xf32, #tpu.memory_space<vmem>>, vector<2x1xf32>,
      %228 = vector.shape_cast %225 : vector<2x1xf32> to vector<1x2x1xf32>
      %cst_61 = arith.constant dense<0.000000e+00> : vector<1xf32>
      %229 = vector.multi_reduction <add>, %228, %cst_61 [1, 2] : vector<1x2x1xf32> to vector<1xf32>
      %230 = vector.shape_cast %229 : vector<1xf32> to vector<1x1x1xf32>
      %231 = vector.extract %230[0, 0, 0] : f32 from vector<1x1x1xf32>
      %cst_62 = arith.constant 2.000000e+00 : f32
      %232 = arith.cmpf oge, %231, %cst_62 : f32
      %233 = arith.extui %232 : i1 to i32
      %c1_i32 = arith.constant 1 : i32
      %234 = arith.addi %arg7, %c1_i32 : i32
      scf.yield %234, %233 : i32, i32
    }
    return
  }
}

</mosaic_0001>

<llo_original>
// kernel: straight_through_policy_2d.1
$region0: #{straight_through_policy_2d.1}
  #allocation0 [shape = 'u32[]', space=smem, size = 0x4, offset = 0x4, fixed_abs, tag = 'smem constant byte address 0x4 - core index']
  #allocation1 [shape = 'u32[144,128]{1,0:T(1,128)}', space=vmem, size = 0x12000, scoped, tag = 'internal scratch']
  #allocation2 [shape = 'f32[2,1]{1,0:T(2,128)}', space=vmem, size = 0x400, scoped, tag = 'scratch operand']
  #allocation3 [shape = 's32[1,1]{1,0:T(1,128)S(1)}', space=vmem, size = 0x200, scoped, tag = 'scoped memory for straight_through_policy_2d.1']
  %s0 = inlined_call_operand.vmem [shape: f32[2,2,256], index: 0, kind: input, shape index: {}]
  %s1 = inlined_call_operand.vmem [shape: f32[2,256], index: 1, kind: input, shape index: {}]
  %s2 = inlined_call_operand.vmem [shape: f32[1,40,4], index: 2, kind: input, shape index: {}]
  %s3 = inlined_call_operand.<no memory space> [shape: s32[1,1], index: 3, kind: input, shape index: {}]
  %s4 = inlined_call_operand.vmem [shape: f32[2,256], index: 4, kind: output, shape index: {0}]
  %s5 = inlined_call_operand.vmem [shape: f32[2,256], index: 5, kind: output, shape index: {1}]
  %6 = xla_tuple %s4, %s5
  %s7 = sld [smem:[#allocation0]]
  $region41: #{straight_through_policy_2d.1} parent=0
    _
  %s9 = ssub.s32 1, %s7
  %s10 = scalar_select 0, %s9, %s7
  %v11 = vstv %s3
  %12 = vst [vmem:[#allocation3] sm:$0x1] %v11
  // Predicated region
  $region2: #{straight_through_policy_2d.1} parent=0 // pred_check
    _
  $region3: #{straight_through_policy_2d.1} parent=0 // pred_check_branch
    %14 = sbr.rel (0) target = $region5
  $region4: #{straight_through_policy_2d.1} parent=0 // pred_region
    _
  $region5: #{straight_through_policy_2d.1} parent=0 // pred_fallthru
    _
  // Predicated region
  $region6: #{straight_through_policy_2d.1} parent=0 // pred_check
    _
  $region7: #{straight_through_policy_2d.1} parent=0 // pred_check_branch
    %16 = sbr.rel (0) target = $region9
  $region8: #{straight_through_policy_2d.1} parent=0 // pred_region
    _
  $region9: #{straight_through_policy_2d.1} parent=0 // pred_fallthru
    _
  // Predicated region
  $region10: #{straight_through_policy_2d.1} parent=0 // pred_check
    _
  $region11: #{straight_through_policy_2d.1} parent=0 // pred_check_branch
    %18 = sbr.rel (0) target = $region13
  $region12: #{straight_through_policy_2d.1} parent=0 // pred_region
    _
  $region13: #{straight_through_policy_2d.1} parent=0 // pred_fallthru
    _
  // Predicated region
  $region14: #{straight_through_policy_2d.1} parent=0 // pred_check
    _
  $region15: #{straight_through_policy_2d.1} parent=0 // pred_check_branch
    %20 = sbr.rel (0) target = $region17
  $region16: #{straight_through_policy_2d.1} parent=0 // pred_region
    _
  $region17: #{straight_through_policy_2d.1} parent=0 // pred_fallthru
    _
  %v21 = vld [vmem:[%s0] sm:$0xf]
  %v22 = vld [vmem:[%s0 + $0x4] sm:$0xf]
  %v23 = vld [vmem:[%s2] sm:$0xff]
  %v24 = vld [vmem:[%s2 + $0x8] sm:$0xff]
  %v25 = vld [vmem:[%s2 + $0x10] sm:$0xff]
  %v26 = vld [vmem:[%s2 + $0x18] sm:$0xff]
  %v27 = vld [vmem:[%s2 + $0x20] sm:$0xff]
  %29 = vset.pattern.permute.xlu0 0
  %30 = vperm.xlu0 %29, %v23
  %v31 = vpop.permute.xlu0 %30
  %34 = vset.pattern.permute.xlu0 0
  %35 = vperm.xlu0 %34, %v24
  %v36 = vpop.permute.xlu0 %35
  %39 = vset.pattern.permute.xlu0 0
  %40 = vperm.xlu0 %39, %v25
  %v41 = vpop.permute.xlu0 %40
  %44 = vset.pattern.permute.xlu0 0
  %45 = vperm.xlu0 %44, %v26
  %v46 = vpop.permute.xlu0 %45
  %49 = vset.pattern.permute.xlu0 0
  %50 = vperm.xlu0 %49, %v27
  %v51 = vpop.permute.xlu0 %50
  %v55 = vlaneseq
  %v56 = vshrl.u32 %v55, 7
  %v57 = vsub.s32 0, %v56
  %v58 = vrot.slane %v21, %v57
  %v59 = vlaneseq
  %v60 = vshrl.u32 %v59, 7
  %v61 = vsub.s32 2, %v60
  %v62 = vrot.slane %v21, %v61
  %v63 = vlaneseq
  %v64 = vshrl.u32 %v63, 7
  %v65 = vsub.s32 0, %v64
  %v66 = vrot.slane %v22, %v65
  %v67 = vlaneseq
  %v68 = vshrl.u32 %v67, 7
  %v69 = vsub.s32 2, %v68
  %v70 = vrot.slane %v22, %v69
  %v75 = vlaneseq
  %v76 = vshrl.u32 %v75, 7
  %v77 = vsub.s32 0, %v76
  %v78 = vrot.slane %v58, %v77
  %v79 = vlaneseq
  %v80 = vshrl.u32 %v79, 7
  %v81 = vsub.s32 0, %v80
  %v82 = vrot.slane %v62, %v81
  %v83 = vlaneseq
  %v84 = vshrl.u32 %v83, 7
  %v85 = vsub.s32 0, %v84
  %v86 = vrot.slane %v66, %v85
  %v87 = vlaneseq
  %v88 = vshrl.u32 %v87, 7
  %v89 = vsub.s32 0, %v88
  %v90 = vrot.slane %v70, %v89
  %v91 = vmul.f32 %v31, %v78
  %v92 = vmul.f32 %v31, %v82
  %v93 = vmul.f32 %v36, %v78
  %v94 = vmul.f32 %v36, %v82
  %v95 = vmul.f32 %v41, %v78
  %v96 = vmul.f32 %v41, %v82
  %v97 = vmul.f32 %v46, %v78
  %v98 = vmul.f32 %v46, %v82
  %v99 = vmul.f32 %v51, %v78
  %v100 = vmul.f32 %v51, %v82
  %v101 = vmul.f32 %v31, %v86
  %v102 = vmul.f32 %v31, %v90
  %v103 = vmul.f32 %v36, %v86
  %v104 = vmul.f32 %v36, %v90
  %v105 = vmul.f32 %v41, %v86
  %v106 = vmul.f32 %v41, %v90
  %v107 = vmul.f32 %v46, %v86
  %v108 = vmul.f32 %v46, %v90
  %v109 = vmul.f32 %v51, %v86
  %v110 = vmul.f32 %v51, %v90
  %111 = vset.pattern.permute.xlu0 2
  %112 = vperm.xlu0 %111, %v23
  %v113 = vpop.permute.xlu0 %112
  %115 = vset.pattern.permute.xlu0 2
  %116 = vperm.xlu0 %115, %v24
  %v117 = vpop.permute.xlu0 %116
  %119 = vset.pattern.permute.xlu0 2
  %120 = vperm.xlu0 %119, %v25
  %v121 = vpop.permute.xlu0 %120
  %123 = vset.pattern.permute.xlu0 2
  %124 = vperm.xlu0 %123, %v26
  %v125 = vpop.permute.xlu0 %124
  %127 = vset.pattern.permute.xlu0 2
  %128 = vperm.xlu0 %127, %v27
  %v129 = vpop.permute.xlu0 %128
  %v131 = vadd.f32 %v113, %v91
  %v132 = vadd.f32 %v113, %v92
  %v133 = vadd.f32 %v117, %v93
  %v134 = vadd.f32 %v117, %v94
  %v135 = vadd.f32 %v121, %v95
  %v136 = vadd.f32 %v121, %v96
  %v137 = vadd.f32 %v125, %v97
  %v138 = vadd.f32 %v125, %v98
  %v139 = vadd.f32 %v129, %v99
  %v140 = vadd.f32 %v129, %v100
  %v141 = vadd.f32 %v113, %v101
  %v142 = vadd.f32 %v113, %v102
  %v143 = vadd.f32 %v117, %v103
  %v144 = vadd.f32 %v117, %v104
  %v145 = vadd.f32 %v121, %v105
  %v146 = vadd.f32 %v121, %v106
  %v147 = vadd.f32 %v125, %v107
  %v148 = vadd.f32 %v125, %v108
  %v149 = vadd.f32 %v129, %v109
  %v150 = vadd.f32 %v129, %v110
  %151 = vset.pattern.permute.xlu0 1
  %152 = vperm.xlu0 %151, %v23
  %v153 = vpop.permute.xlu0 %152
  %155 = vset.pattern.permute.xlu0 1
  %156 = vperm.xlu0 %155, %v24
  %v157 = vpop.permute.xlu0 %156
  %159 = vset.pattern.permute.xlu0 1
  %160 = vperm.xlu0 %159, %v25
  %v161 = vpop.permute.xlu0 %160
  %163 = vset.pattern.permute.xlu0 1
  %164 = vperm.xlu0 %163, %v26
  %v165 = vpop.permute.xlu0 %164
  %167 = vset.pattern.permute.xlu0 1
  %168 = vperm.xlu0 %167, %v27
  %v169 = vpop.permute.xlu0 %168
  %v171 = vlaneseq
  %v172 = vshrl.u32 %v171, 7
  %v173 = vsub.s32 1, %v172
  %v174 = vrot.slane %v21, %v173
  %v175 = vlaneseq
  %v176 = vshrl.u32 %v175, 7
  %v177 = vsub.s32 3, %v176
  %v178 = vrot.slane %v21, %v177
  %v179 = vlaneseq
  %v180 = vshrl.u32 %v179, 7
  %v181 = vsub.s32 1, %v180
  %v182 = vrot.slane %v22, %v181
  %v183 = vlaneseq
  %v184 = vshrl.u32 %v183, 7
  %v185 = vsub.s32 3, %v184
  %v186 = vrot.slane %v22, %v185
  %v191 = vlaneseq
  %v192 = vshrl.u32 %v191, 7
  %v193 = vsub.s32 1, %v192
  %v194 = vrot.slane %v174, %v193
  %v195 = vlaneseq
  %v196 = vshrl.u32 %v195, 7
  %v197 = vsub.s32 1, %v196
  %v198 = vrot.slane %v178, %v197
  %v199 = vlaneseq
  %v200 = vshrl.u32 %v199, 7
  %v201 = vsub.s32 1, %v200
  %v202 = vrot.slane %v182, %v201
  %v203 = vlaneseq
  %v204 = vshrl.u32 %v203, 7
  %v205 = vsub.s32 1, %v204
  %v206 = vrot.slane %v186, %v205
  %v207 = vmul.f32 %v153, %v194
  %v208 = vmul.f32 %v153, %v198
  %v209 = vmul.f32 %v157, %v194
  %v210 = vmul.f32 %v157, %v198
  %v211 = vmul.f32 %v161, %v194
  %v212 = vmul.f32 %v161, %v198
  %v213 = vmul.f32 %v165, %v194
  %v214 = vmul.f32 %v165, %v198
  %v215 = vmul.f32 %v169, %v194
  %v216 = vmul.f32 %v169, %v198
  %v217 = vmul.f32 %v153, %v202
  %v218 = vmul.f32 %v153, %v206
  %v219 = vmul.f32 %v157, %v202
  %v220 = vmul.f32 %v157, %v206
  %v221 = vmul.f32 %v161, %v202
  %v222 = vmul.f32 %v161, %v206
  %v223 = vmul.f32 %v165, %v202
  %v224 = vmul.f32 %v165, %v206
  %v225 = vmul.f32 %v169, %v202
  %v226 = vmul.f32 %v169, %v206
  %v227 = vadd.f32 %v131, %v207
  %v228 = vadd.f32 %v132, %v208
  %v229 = vadd.f32 %v133, %v209
  %v230 = vadd.f32 %v134, %v210
  %v231 = vadd.f32 %v135, %v211
  %v232 = vadd.f32 %v136, %v212
  %v233 = vadd.f32 %v137, %v213
  %v234 = vadd.f32 %v138, %v214
  %v235 = vadd.f32 %v139, %v215
  %v236 = vadd.f32 %v140, %v216
  %v237 = vadd.f32 %v141, %v217
  %v238 = vadd.f32 %v142, %v218
  %v239 = vadd.f32 %v143, %v219
  %v240 = vadd.f32 %v144, %v220
  %v241 = vadd.f32 %v145, %v221
  %v242 = vadd.f32 %v146, %v222
  %v243 = vadd.f32 %v147, %v223
  %v244 = vadd.f32 %v148, %v224
  %v245 = vadd.f32 %v149, %v225
  %v246 = vadd.f32 %v150, %v226
  %vm247 = vcmp.gt.f32.partialorder %v227, 0.0
  %vm248 = vcmp.gt.f32.partialorder %v228, 0.0
  %vm249 = vcmp.gt.f32.partialorder %v229, 0.0
  %vm250 = vcmp.gt.f32.partialorder %v230, 0.0
  %vm251 = vcmp.gt.f32.partialorder %v231, 0.0
  %vm252 = vcmp.gt.f32.partialorder %v232, 0.0
  %vm253 = vcmp.gt.f32.partialorder %v233, 0.0
  %vm254 = vcmp.gt.f32.partialorder %v234, 0.0
  %vm255 = vcmp.gt.f32.partialorder %v235, 0.0
  %vm256 = vcmp.gt.f32.partialorder %v236, 0.0
  %vm257 = vcmp.gt.f32.partialorder %v237, 0.0
  %vm258 = vcmp.gt.f32.partialorder %v238, 0.0
  %vm259 = vcmp.gt.f32.partialorder %v239, 0.0
  %vm260 = vcmp.gt.f32.partialorder %v240, 0.0
  %vm261 = vcmp.gt.f32.partialorder %v241, 0.0
  %vm262 = vcmp.gt.f32.partialorder %v242, 0.0
  %vm263 = vcmp.gt.f32.partialorder %v243, 0.0
  %vm264 = vcmp.gt.f32.partialorder %v244, 0.0
  %vm265 = vcmp.gt.f32.partialorder %v245, 0.0
  %vm266 = vcmp.gt.f32.partialorder %v246, 0.0
  %v267 = vmul.f32 %v227, 0.2
  %v268 = vmul.f32 %v228, 0.2
  %v269 = vmul.f32 %v229, 0.2
  %v270 = vmul.f32 %v230, 0.2
  %v271 = vmul.f32 %v231, 0.2
  %v272 = vmul.f32 %v232, 0.2
  %v273 = vmul.f32 %v233, 0.2
  %v274 = vmul.f32 %v234, 0.2
  %v275 = vmul.f32 %v235, 0.2
  %v276 = vmul.f32 %v236, 0.2
  %v277 = vmul.f32 %v237, 0.2
  %v278 = vmul.f32 %v238, 0.2
  %v279 = vmul.f32 %v239, 0.2
  %v280 = vmul.f32 %v240, 0.2
  %v281 = vmul.f32 %v241, 0.2
  %v282 = vmul.f32 %v242, 0.2
  %v283 = vmul.f32 %v243, 0.2
  %v284 = vmul.f32 %v244, 0.2
  %v285 = vmul.f32 %v245, 0.2
  %v286 = vmul.f32 %v246, 0.2
  %v287 = vsel %vm247, %v227, %v267
  %v288 = vsel %vm248, %v228, %v268
  %v289 = vsel %vm249, %v229, %v269
  %v290 = vsel %vm250, %v230, %v270
  %v291 = vsel %vm251, %v231, %v271
  %v292 = vsel %vm252, %v232, %v272
  %v293 = vsel %vm253, %v233, %v273
  %v294 = vsel %vm254, %v234, %v274
  %v295 = vsel %vm255, %v235, %v275
  %v296 = vsel %vm256, %v236, %v276
  %v297 = vsel %vm257, %v237, %v277
  %v298 = vsel %vm258, %v238, %v278
  %v299 = vsel %vm259, %v239, %v279
  %v300 = vsel %vm260, %v240, %v280
  %v301 = vsel %vm261, %v241, %v281
  %v302 = vsel %vm262, %v242, %v282
  %v303 = vsel %vm263, %v243, %v283
  %v304 = vsel %vm264, %v244, %v284
  %v305 = vsel %vm265, %v245, %v285
  %v306 = vsel %vm266, %v246, %v286
  %307 = vset.pattern.permute.xlu0 3
  %308 = vperm.xlu0 %307, %v23
  %v309 = vpop.permute.xlu0 %308
  %311 = vset.pattern.permute.xlu0 3
  %312 = vperm.xlu0 %311, %v24
  %v313 = vpop.permute.xlu0 %312
  %315 = vset.pattern.permute.xlu0 3
  %316 = vperm.xlu0 %315, %v25
  %v317 = vpop.permute.xlu0 %316
  %319 = vset.pattern.permute.xlu0 3
  %320 = vperm.xlu0 %319, %v26
  %v321 = vpop.permute.xlu0 %320
  %323 = vset.pattern.permute.xlu0 3
  %324 = vperm.xlu0 %323, %v27
  %v325 = vpop.permute.xlu0 %324
  %v327 = vmul.f32 %v309, %v287
  %v328 = vmul.f32 %v309, %v288
  %v329 = vmul.f32 %v313, %v289
  %v330 = vmul.f32 %v313, %v290
  %v331 = vmul.f32 %v317, %v291
  %v332 = vmul.f32 %v317, %v292
  %v333 = vmul.f32 %v321, %v293
  %v334 = vmul.f32 %v321, %v294
  %v335 = vmul.f32 %v325, %v295
  %v336 = vmul.f32 %v325, %v296
  %v337 = vmul.f32 %v309, %v297
  %v338 = vmul.f32 %v309, %v298
  %v339 = vmul.f32 %v313, %v299
  %v340 = vmul.f32 %v313, %v300
  %v341 = vmul.f32 %v317, %v301
  %v342 = vmul.f32 %v317, %v302
  %v343 = vmul.f32 %v321, %v303
  %v344 = vmul.f32 %v321, %v304
  %v345 = vmul.f32 %v325, %v305
  %v346 = vmul.f32 %v325, %v306
  %v347 = vadd.f32 %v327, %v329
  %v348 = vadd.f32 %v347, %v331
  %v349 = vadd.f32 %v348, %v333
  %v350 = vadd.f32 %v349, %v335
  %v351 = vrot.slane %v350, 4
  %v352 = vadd.f32 %v350, %v351
  %v353 = vrot.slane %v352, 2
  %v354 = vadd.f32 %v352, %v353
  %v355 = vrot.slane %v354, 1
  %v356 = vadd.f32 %v354, %v355
  %v357 = vadd.f32 %v328, %v330
  %v358 = vadd.f32 %v357, %v332
  %v359 = vadd.f32 %v358, %v334
  %v360 = vadd.f32 %v359, %v336
  %v361 = vrot.slane %v360, 4
  %v362 = vadd.f32 %v360, %v361
  %v363 = vrot.slane %v362, 2
  %v364 = vadd.f32 %v362, %v363
  %v365 = vrot.slane %v364, 1
  %v366 = vadd.f32 %v364, %v365
  %v367 = vadd.f32 %v337, %v339
  %v368 = vadd.f32 %v367, %v341
  %v369 = vadd.f32 %v368, %v343
  %v370 = vadd.f32 %v369, %v345
  %v371 = vrot.slane %v370, 4
  %v372 = vadd.f32 %v370, %v371
  %v373 = vrot.slane %v372, 2
  %v374 = vadd.f32 %v372, %v373
  %v375 = vrot.slane %v374, 1
  %v376 = vadd.f32 %v374, %v375
  %v377 = vadd.f32 %v338, %v340
  %v378 = vadd.f32 %v377, %v342
  %v379 = vadd.f32 %v378, %v344
  %v380 = vadd.f32 %v379, %v346
  %v381 = vrot.slane %v380, 4
  %v382 = vadd.f32 %v380, %v381
  %v383 = vrot.slane %v382, 2
  %v384 = vadd.f32 %v382, %v383
  %v385 = vrot.slane %v384, 1
  %v386 = vadd.f32 %v384, %v385
  %v387 = vld [vmem:[%s1] sm:$0xf]
  %v388 = vsub.f32 1.0, %v387
  %v389 = vmul.f32 %v356, -2.0
  %v390 = vmul.f32 %v366, -2.0
  %v391 = vmul.f32 %v376, -2.0
  %v392 = vmul.f32 %v386, -2.0
  %v393 = vmul.f32 %v389, 1.442695
  %v394 = vpow.pop %v393
  %v395 = vmul.f32 %v390, 1.442695
  %v396 = vpow.pop %v395
  %v397 = vmul.f32 %v391, 1.442695
  %v398 = vpow.pop %v397
  %v399 = vmul.f32 %v392, 1.442695
  %v400 = vpow.pop %v399
  %v401 = vadd.f32 %v394, 1.0
  %v402 = vadd.f32 %v396, 1.0
  %v403 = vadd.f32 %v398, 1.0
  %v404 = vadd.f32 %v400, 1.0
  %v409 = vcombine.low %v401, %v402
  %v411 = vunpack.c.l.s4 1983009808
  %v412 = vunpack.c.0.s8 %v411
  %v413 = vlaneseq
  %v414 = vshrl.u32 %v413, 7
  %v415 = vsub.s32 %v412, %v414
  %v416 = vrot.slane %v409, %v415
  %v417 = vcombine.low %v403, %v404
  %v419 = vunpack.c.l.s4 1983009808
  %v420 = vunpack.c.0.s8 %v419
  %v421 = vlaneseq
  %v422 = vshrl.u32 %v421, 7
  %v423 = vsub.s32 %v420, %v422
  %v424 = vrot.slane %v417, %v423
  %vm425 = vcmask 1044484
  %v426 = vsel %vm425, %v416, %v416
  %vm427 = vcmask 1046534
  %v428 = vsel %vm427, %v416, %v426
  %v429 = vrot.slane %v424, 7
  %vm430 = vcmask 1041409
  %v431 = vsel %vm430, %v429, %v428
  %vm432 = vcmask 1043459
  %v433 = vsel %vm432, %v429, %v431
  %vm434 = vcmask 1045509
  %v435 = vsel %vm434, %v429, %v433
  %vm436 = vcmask 1047559
  %v437 = vsel %vm436, %v429, %v435
  %v439 = vrcp.pop %v437
  %v440 = vmul.f32 %v388, %v439
  %v443 = vunpack.c.l.s4 1983009808
  %v444 = vunpack.c.0.s8 %v443
  %v445 = vlaneseq
  %v446 = vshrl.u32 %v445, 7
  %v447 = vsub.s32 %v444, %v446
  %v448 = vrot.slane %v388, %v447
  %v449 = vcombine.high %v448, %v448
  %vm452 = vcmask 1041408
  %v453 = vsel %vm452, %v448, 0.0
  %v454 = vsel %vm452, %v449, 0.0
  %v455 = vadd.f32 %v453, %v454
  %456 = vadd.xlane.f32.xlu0 %v455
  %v457 = vpop.xlane.xlu0 %456
  %v458 = vmax.f32 %v457, 1.0
  %v461 = vunpack.c.l.s4 1983009808
  %v462 = vunpack.c.0.s8 %v461
  %v463 = vlaneseq
  %v464 = vshrl.u32 %v463, 7
  %v465 = vsub.s32 %v462, %v464
  %v466 = vrot.slane %v440, %v465
  %v467 = vcombine.high %v466, %v466
  %v470 = vsel %vm452, %v466, 0.0
  %v471 = vsel %vm452, %v467, 0.0
  %v472 = vadd.f32 %v470, %v471
  %473 = vadd.xlane.f32.xlu0 %v472
  %v474 = vpop.xlane.xlu0 %473
  %v475 = vrcp.pop %v458
  %v476 = vmul.f32 %v474, %v475
  %v477 = vmul.f32 8.0, %v475
  %v478 = vmax.f32 %v476, 1e-12
  %v479 = vrcp.pop %v478
  %v480 = vmul.f32 %v477, %v479
  %v481 = vsub.f32 1.0, %v477
  %v482 = vsub.f32 1.0, %v476
  %v483 = vmax.f32 %v482, 1e-12
  %v484 = vrcp.pop %v483
  %v485 = vmul.f32 %v481, %v484
  %vm486 = vcmp.le.f32.partialorder %v480, 1.0
  %v489 = vunpack.c.l.s4 269488144
  %v490 = vunpack.c.0.s8 %v489
  %v491 = vlaneseq
  %v492 = vshrl.u32 %v491, 7
  %v493 = vsub.s32 %v490, %v492
  %v494 = vrot.slane %v480, %v493
  %v496 = vmul.f32 %v440, %v494
  %v497 = vsub.f32 1.0, %v440
  %v500 = vunpack.c.l.s4 269488144
  %v501 = vunpack.c.0.s8 %v500
  %v502 = vlaneseq
  %v503 = vshrl.u32 %v502, 7
  %v504 = vsub.s32 %v501, %v503
  %v505 = vrot.slane %v485, %v504
  %v507 = vmul.f32 %v497, %v505
  %v508 = vsub.f32 1.0, %v507
  %v509 = vsel %vm486, 1, 0
  %vm510 = vcmp.eq.s32.totalorder %v509, 1
  %v513 = vunpack.c.l.s4 1983009808
  %v514 = vunpack.c.0.s8 %v513
  %v515 = vlaneseq
  %v516 = vshrl.u32 %v515, 7
  %v517 = vsub.s32 %v514, %v516
  %v518 = vrot.slane %v496, %v517
  %v519 = vcombine.high %v518, %v518
  %v524 = vunpack.c.l.s4 1983009808
  %v525 = vunpack.c.0.s8 %v524
  %v526 = vlaneseq
  %v527 = vshrl.u32 %v526, 7
  %v528 = vsub.s32 %v525, %v527
  %v529 = vrot.slane %v508, %v528
  %v530 = vcombine.high %v529, %v529
  %v533 = vsel %vm510, %v518, %v529
  %v534 = vsel %vm510, %v519, %v530
  %vm535 = vcmp.eq.f32.partialorder %v387, 0.0
  %v538 = vcombine.low %v533, %v534
  %v540 = vunpack.c.l.s4 1983009808
  %v541 = vunpack.c.0.s8 %v540
  %v542 = vlaneseq
  %v543 = vshrl.u32 %v542, 7
  %v544 = vsub.s32 %v541, %v543
  %v545 = vrot.slane %v538, %v544
  %v547 = vsel %vm535, %v545, 0.0
  %548 = vst [vmem:[%s5] sm:$0xf] %v547
  %v551 = vunpack.c.l.s4 1983009808
  %v552 = vunpack.c.0.s8 %v551
  %v553 = vlaneseq
  %v554 = vshrl.u32 %v553, 7
  %v555 = vsub.s32 %v552, %v554
  %v556 = vrot.slane %v547, %v555
  %v557 = vcombine.high %v556, %v556
  %v560 = vsel %vm452, %v556, 0.0
  %v561 = vsel %vm452, %v557, 0.0
  %v562 = vadd.f32 %v560, %v561
  %563 = vadd.xlane.f32.xlu0 %v562
  %v564 = vpop.xlane.xlu0 %563
  %v565 = vand.u32 2147483647, %v564
  %v566 = vmul.f32 %v565, 1e-05
  %v567 = vadd.f32 %v566, 0.256
  %v569 = vlaneseq
  %v570 = vshrl.u32 %v569, 7
  %v571 = vsub.s32 0, %v570
  %v572 = vrot.slane %v564, %v571
  %v573 = vlaneseq
  %v574 = vshrl.u32 %v573, 7
  %v575 = vsub.s32 1, %v574
  %v576 = vrot.slane %v564, %v575
  %v580 = vlaneseq
  %v581 = vshrl.u32 %v580, 7
  %v582 = vsub.s32 0, %v581
  %v583 = vrot.slane %v567, %v582
  %v584 = vlaneseq
  %v585 = vshrl.u32 %v584, 7
  %v586 = vsub.s32 1, %v585
  %v587 = vrot.slane %v567, %v586
  %v591 = vunpack.c.l.s4 1966171168
  %v592 = vunpack.c.0.s8 %v591
  %v593 = vlaneseq
  %v594 = vshrl.u32 %v593, 7
  %v595 = vsub.s32 %v592, %v594
  %v596 = vrot.slane %v547, %v595
  %v597 = vcombine.high %v596, %v596
  %v600 = vmul.f32 %v596, 16777216.0
  %v601 = vmul.f32 %v597, 16777216.0
  %v602 = vlaneseq
  %v603 = vand.u32 %v602, 127
  %v604 = vadd.s32 %v603, 128
  %v605 = vlaneseq
  %v606 = vshrl.u32 %v605, 7
  %v607 = vld [vmem:[#allocation3] sm:$0x1]
  %v608 = vadd.s32 %v606, 8
  %v609 = vmul.u32 %v606, 256
  %v610 = vmul.u32 %v608, 256
  %v611 = vadd.s32 %v609, %v603
  %v612 = vadd.s32 %v609, %v604
  %v613 = vadd.s32 %v610, %v603
  %v614 = vadd.s32 %v610, %v604
  %v615 = vlaneseq
  %v616 = vshrl.u32 %v615, 7
  %v617 = vsub.s32 0, %v616
  %v618 = vrot.slane %v607, %v617
  %619 = vset.pattern.permute.xlu0 0
  %620 = vperm.xlu0 %619, %v618
  %v621 = vpop.permute.xlu0 %620
  %v622 = vadd.s32 %v611, %v621
  %v623 = vadd.s32 %v612, %v621
  %v624 = vadd.s32 %v613, %v621
  %v625 = vadd.s32 %v614, %v621
  %vm626 = vcmask 1024
  %627 = vst.msk [vmem:[#allocation2] sm:$0x3] %vm626, 0.0
  %628 = vst [vmem:[%s4] sm:$0xf] 0.0
  // While loop
  $region18: #{straight_through_policy_2d.1} parent=0 // loop_pre_header
    _
  $region19: #{straight_through_policy_2d.1} parent=0 // loop_header
    %s630 = sphi 0, %s960
    %s631 = sphi 0, %s959
    %p632 = scmp.lt.s32.totalorder %s630, 128
    %p633 = scmp.eq.s32.totalorder %s631, 0
    %p634 = pnand %p632, %p633
    %p635 = pneg %p634
  $region20: #{straight_through_policy_2d.1} parent=0 // loop_header_branch
    %637 = sbr.rel (%p634) target = $region24
  $region21: #{straight_through_policy_2d.1} parent=0 // loop_body
    %s638 = smul.u32 %s630, 4096
    %v639 = vstv %s638
    %v640 = vadd.s32 %v622, %v639
    %v641 = vadd.s32 %v623, %v639
    %v642 = vadd.s32 %v624, %v639
    %v643 = vadd.s32 %v625, %v639
    %v644 = vmul.u32 %v640, 2654435769
    %v645 = vmul.u32 %v641, 2654435769
    %v646 = vmul.u32 %v642, 2654435769
    %v647 = vmul.u32 %v643, 2654435769
    %v648 = vshra.s32 %v644, 16
    %v649 = vshra.s32 %v645, 16
    %v650 = vshra.s32 %v646, 16
    %v651 = vshra.s32 %v647, 16
    %v652 = vand.u32 %v648, 65535
    %v653 = vand.u32 %v649, 65535
    %v654 = vand.u32 %v650, 65535
    %v655 = vand.u32 %v651, 65535
    %v656 = vxor.u32 %v644, %v652
    %v657 = vxor.u32 %v645, %v653
    %v658 = vxor.u32 %v646, %v654
    %v659 = vxor.u32 %v647, %v655
    %v660 = vmul.u32 %v656, 2246822507
    %v661 = vmul.u32 %v657, 2246822507
    %v662 = vmul.u32 %v658, 2246822507
    %v663 = vmul.u32 %v659, 2246822507
    %v664 = vshra.s32 %v660, 13
    %v665 = vshra.s32 %v661, 13
    %v666 = vshra.s32 %v662, 13
    %v667 = vshra.s32 %v663, 13
    %v668 = vand.u32 %v664, 524287
    %v669 = vand.u32 %v665, 524287
    %v670 = vand.u32 %v666, 524287
    %v671 = vand.u32 %v667, 524287
    %v672 = vxor.u32 %v660, %v668
    %v673 = vxor.u32 %v661, %v669
    %v674 = vxor.u32 %v662, %v670
    %v675 = vxor.u32 %v663, %v671
    %v676 = vmul.u32 %v672, 3266489909
    %v677 = vmul.u32 %v673, 3266489909
    %v678 = vmul.u32 %v674, 3266489909
    %v679 = vmul.u32 %v675, 3266489909
    %v680 = vshra.s32 %v676, 16
    %v681 = vshra.s32 %v677, 16
    %v682 = vshra.s32 %v678, 16
    %v683 = vshra.s32 %v679, 16
    %v684 = vand.u32 %v680, 65535
    %v685 = vand.u32 %v681, 65535
    %v686 = vand.u32 %v682, 65535
    %v687 = vand.u32 %v683, 65535
    %v688 = vxor.u32 %v676, %v684
    %v689 = vxor.u32 %v677, %v685
    %v690 = vxor.u32 %v678, %v686
    %v691 = vxor.u32 %v679, %v687
    %v692 = vshra.s32 %v688, 8
    %v693 = vshra.s32 %v689, 8
    %v694 = vshra.s32 %v690, 8
    %v695 = vshra.s32 %v691, 8
    %v696 = vand.u32 %v692, 16777215
    %v697 = vand.u32 %v693, 16777215
    %v698 = vand.u32 %v694, 16777215
    %v699 = vand.u32 %v695, 16777215
    %v700 = vcvt.s32.f32 %v696
    %v701 = vcvt.s32.f32 %v697
    %v702 = vcvt.s32.f32 %v698
    %v703 = vcvt.s32.f32 %v699
    %v706 = vlaneseq
    %v707 = vshrl.u32 %v706, 7
    %v708 = vsub.s32 0, %v707
    %v709 = vrot.slane %v600, %v708
    %v710 = vlaneseq
    %v711 = vshrl.u32 %v710, 7
    %v712 = vsub.s32 1, %v711
    %v713 = vrot.slane %v600, %v712
    %v714 = vlaneseq
    %v715 = vshrl.u32 %v714, 7
    %v716 = vsub.s32 0, %v715
    %v717 = vrot.slane %v601, %v716
    %v718 = vlaneseq
    %v719 = vshrl.u32 %v718, 7
    %v720 = vsub.s32 1, %v719
    %v721 = vrot.slane %v601, %v720
    %vm726 = vcmp.lt.f32.partialorder %v700, %v709
    %vm727 = vcmp.lt.f32.partialorder %v701, %v713
    %vm728 = vcmp.lt.f32.partialorder %v702, %v717
    %vm729 = vcmp.lt.f32.partialorder %v703, %v721
    %v730 = vsel %vm726, 1, 0
    %v731 = vsel %vm727, 1, 0
    %v732 = vsel %vm728, 1, 0
    %v733 = vsel %vm729, 1, 0
    %v734 = vcvt.s32.f32 %v730
    %v735 = vcvt.s32.f32 %v731
    %v736 = vcvt.s32.f32 %v732
    %v737 = vcvt.s32.f32 %v733
    %v738 = vadd.f32 %v734, %v735
    %739 = vadd.xlane.f32.xlu0 %v738
    %v740 = vpop.xlane.xlu0 %739
    %v741 = vadd.f32 %v736, %v737
    %742 = vadd.xlane.f32.xlu0 %v741
    %v743 = vpop.xlane.xlu0 %742
    %v744 = vsub.f32 %v740, %v572
    %v745 = vsub.f32 %v743, %v576
    %v746 = vand.u32 2147483647, %v744
    %v747 = vand.u32 2147483647, %v745
    %vm748 = vcmp.le.f32.partialorder %v746, %v583
    %vm749 = vcmp.le.f32.partialorder %v747, %v587
    %v750 = vsel %vm748, 1, 0
    %v751 = vsel %vm749, 1, 0
    %v752 = vcvt.s32.f32 %v750
    %v753 = vcvt.s32.f32 %v751
    %v754 = vld [vmem:[#allocation2] sm:$0x3]
    %v755 = vld [vmem:[%s4] sm:$0xf]
    %vm756 = vcmp.gt.f32.partialorder %v754, 0.5
    %v757 = vsel %vm756, 1, 0
    %758 = vset.pattern.permute.xlu0 0
    %759 = vperm.xlu0 %758, %v757
    %v760 = vpop.permute.xlu0 %759
    %vm761 = vcmp.eq.s32.totalorder %v760, 1
    %v764 = vunpack.c.l.s4 1983009808
    %v765 = vunpack.c.0.s8 %v764
    %v766 = vlaneseq
    %v767 = vshrl.u32 %v766, 7
    %v768 = vsub.s32 %v765, %v767
    %v769 = vrot.slane %v755, %v768
    %v770 = vcombine.high %v769, %v769
    %v777 = vrot.slane %v736, 7
    %v778 = vsel %vm430, %v777, %v734
    %v779 = vrot.slane %v737, 7
    %v780 = vsel %vm430, %v779, %v735
    %v783 = vsel %vm761, %v769, %v778
    %v784 = vsel %vm761, %v770, %v780
    %v787 = vrot.slane %v753, 7
    %v788 = vsel %vm430, %v787, %v752
    %v790 = vmax.f32 %v754, %v788
    %vm791 = vcmp.gt.f32.partialorder %v790, 0.5
    %v792 = vsel %vm791, 1, 0
    %793 = vset.pattern.permute.xlu0 0
    %794 = vperm.xlu0 %793, %v792
    %v795 = vpop.permute.xlu0 %794
    %vm796 = vcmp.eq.s32.totalorder %v795, 1
    %v797 = vrot.slane %v734, 1
    %v798 = vsel %vm430, %v736, %v797
    %v799 = vrot.slane %v735, 1
    %v800 = vsel %vm430, %v737, %v799
    %v803 = vsel %vm796, %v783, %v798
    %v804 = vsel %vm796, %v784, %v800
    %v805 = vrot.slane %v752, 1
    %v806 = vsel %vm430, %v753, %v805
    %v808 = vmax.f32 %v790, %v806
    %vm809 = vcmp.gt.f32.partialorder %v808, 0.5
    %v810 = vsel %vm809, 1, 0
    %811 = vset.pattern.permute.xlu0 0
    %812 = vperm.xlu0 %811, %v810
    %v813 = vpop.permute.xlu0 %812
    %vm814 = vcmp.eq.s32.totalorder %v813, 1
    %v815 = vrot.slane %v734, 2
    %v816 = vrot.slane %v736, 1
    %v817 = vsel %vm430, %v816, %v815
    %v818 = vrot.slane %v735, 2
    %v819 = vrot.slane %v737, 1
    %v820 = vsel %vm430, %v819, %v818
    %v823 = vsel %vm814, %v803, %v817
    %v824 = vsel %vm814, %v804, %v820
    %v825 = vrot.slane %v752, 2
    %v826 = vrot.slane %v753, 1
    %v827 = vsel %vm430, %v826, %v825
    %v829 = vmax.f32 %v808, %v827
    %vm830 = vcmp.gt.f32.partialorder %v829, 0.5
    %v831 = vsel %vm830, 1, 0
    %832 = vset.pattern.permute.xlu0 0
    %833 = vperm.xlu0 %832, %v831
    %v834 = vpop.permute.xlu0 %833
    %vm835 = vcmp.eq.s32.totalorder %v834, 1
    %v836 = vrot.slane %v734, 3
    %v837 = vrot.slane %v736, 2
    %v838 = vsel %vm430, %v837, %v836
    %v839 = vrot.slane %v735, 3
    %v840 = vrot.slane %v737, 2
    %v841 = vsel %vm430, %v840, %v839
    %v844 = vsel %vm835, %v823, %v838
    %v845 = vsel %vm835, %v824, %v841
    %v846 = vrot.slane %v752, 3
    %v847 = vrot.slane %v753, 2
    %v848 = vsel %vm430, %v847, %v846
    %v850 = vmax.f32 %v829, %v848
    %vm851 = vcmp.gt.f32.partialorder %v850, 0.5
    %v852 = vsel %vm851, 1, 0
    %853 = vset.pattern.permute.xlu0 0
    %854 = vperm.xlu0 %853, %v852
    %v855 = vpop.permute.xlu0 %854
    %vm856 = vcmp.eq.s32.totalorder %v855, 1
    %v857 = vrot.slane %v734, 4
    %v858 = vrot.slane %v736, 3
    %v859 = vsel %vm430, %v858, %v857
    %v860 = vrot.slane %v735, 4
    %v861 = vrot.slane %v737, 3
    %v862 = vsel %vm430, %v861, %v860
    %v865 = vsel %vm856, %v844, %v859
    %v866 = vsel %vm856, %v845, %v862
    %v867 = vrot.slane %v752, 4
    %v868 = vrot.slane %v753, 3
    %v869 = vsel %vm430, %v868, %v867
    %v871 = vmax.f32 %v850, %v869
    %vm872 = vcmp.gt.f32.partialorder %v871, 0.5
    %v873 = vsel %vm872, 1, 0
    %874 = vset.pattern.permute.xlu0 0
    %875 = vperm.xlu0 %874, %v873
    %v876 = vpop.permute.xlu0 %875
    %vm877 = vcmp.eq.s32.totalorder %v876, 1
    %v878 = vrot.slane %v734, 5
    %v879 = vrot.slane %v736, 4
    %v880 = vsel %vm430, %v879, %v878
    %v881 = vrot.slane %v735, 5
    %v882 = vrot.slane %v737, 4
    %v883 = vsel %vm430, %v882, %v881
    %v886 = vsel %vm877, %v865, %v880
    %v887 = vsel %vm877, %v866, %v883
    %v888 = vrot.slane %v752, 5
    %v889 = vrot.slane %v753, 4
    %v890 = vsel %vm430, %v889, %v888
    %v892 = vmax.f32 %v871, %v890
    %vm893 = vcmp.gt.f32.partialorder %v892, 0.5
    %v894 = vsel %vm893, 1, 0
    %895 = vset.pattern.permute.xlu0 0
    %896 = vperm.xlu0 %895, %v894
    %v897 = vpop.permute.xlu0 %896
    %vm898 = vcmp.eq.s32.totalorder %v897, 1
    %v899 = vrot.slane %v734, 6
    %v900 = vrot.slane %v736, 5
    %v901 = vsel %vm430, %v900, %v899
    %v902 = vrot.slane %v735, 6
    %v903 = vrot.slane %v737, 5
    %v904 = vsel %vm430, %v903, %v902
    %v907 = vsel %vm898, %v886, %v901
    %v908 = vsel %vm898, %v887, %v904
    %v909 = vrot.slane %v752, 6
    %v910 = vrot.slane %v753, 5
    %v911 = vsel %vm430, %v910, %v909
    %v913 = vmax.f32 %v892, %v911
    %vm914 = vcmp.gt.f32.partialorder %v913, 0.5
    %v915 = vsel %vm914, 1, 0
    %916 = vset.pattern.permute.xlu0 0
    %917 = vperm.xlu0 %916, %v915
    %v918 = vpop.permute.xlu0 %917
    %vm919 = vcmp.eq.s32.totalorder %v918, 1
    %v920 = vrot.slane %v734, 7
    %v921 = vrot.slane %v736, 6
    %v922 = vsel %vm430, %v921, %v920
    %v923 = vrot.slane %v735, 7
    %v924 = vrot.slane %v737, 6
    %v925 = vsel %vm430, %v924, %v923
    %v928 = vsel %vm919, %v907, %v922
    %v929 = vsel %vm919, %v908, %v925
    %v930 = vrot.slane %v752, 7
    %v931 = vrot.slane %v753, 6
    %v932 = vsel %vm430, %v931, %v930
    %v934 = vmax.f32 %v913, %v932
    %v937 = vcombine.low %v928, %v929
    %v939 = vunpack.c.l.s4 1983009808
    %v940 = vunpack.c.0.s8 %v939
    %v941 = vlaneseq
    %v942 = vshrl.u32 %v941, 7
    %v943 = vsub.s32 %v940, %v942
    %v944 = vrot.slane %v937, %v943
    %946 = vst [vmem:[%s4] sm:$0xf] %v944
    %947 = vst.msk [vmem:[#allocation2] sm:$0x3] %vm626, %v934
    %v948 = vsel %vm626, %v934, 0.0
    %949 = vadd.xlane.f32.xlu0 %v948
    %v950 = vpop.xlane.xlu0 %949
    %v951 = vrot.slane %v950, 4
    %v952 = vadd.f32 %v950, %v951
    %v953 = vrot.slane %v952, 2
    %v954 = vadd.f32 %v952, %v953
    %v955 = vrot.slane %v954, 1
    %v956 = vadd.f32 %v954, %v955
    %s957 = vtos %v956
    %p958 = scmp.ge.f32.partialorder %s957, 2.0
    %s959 = scalar_select %p958, 1, 0
    %s960 = sadd.s32 %s630, 1
  $region22: #{straight_through_policy_2d.1} parent=0 // loop_footer
    _
  $region23: #{straight_through_policy_2d.1} parent=0 // loop_footer_branch
    %629 = sbr.rel target = $region19
  $region24: #{straight_through_policy_2d.1} parent=0 // loop_exit
    _
  // Predicated region
  $region25: #{straight_through_policy_2d.1} parent=0 // pred_check
    _
  $region26: #{straight_through_policy_2d.1} parent=0 // pred_check_branch
    %962 = sbr.rel (0) target = $region28
  $region27: #{straight_through_policy_2d.1} parent=0 // pred_region
    _
  $region28: #{straight_through_policy_2d.1} parent=0 // pred_fallthru
    _
  // Predicated region
  $region29: #{straight_through_policy_2d.1} parent=0 // pred_check
    _
  $region30: #{straight_through_policy_2d.1} parent=0 // pred_check_branch
    %964 = sbr.rel (0) target = $region32
  $region31: #{straight_through_policy_2d.1} parent=0 // pred_region
    _
  $region32: #{straight_through_policy_2d.1} parent=0 // pred_fallthru
    _
  // Predicated region
  $region33: #{straight_through_policy_2d.1} parent=0 // pred_check
    _
  $region34: #{straight_through_policy_2d.1} parent=0 // pred_check_branch
    %966 = sbr.rel (0) target = $region36
  $region35: #{straight_through_policy_2d.1} parent=0 // pred_region
    _
  $region36: #{straight_through_policy_2d.1} parent=0 // pred_fallthru
    _
  // Predicated region
  $region37: #{straight_through_policy_2d.1} parent=0 // pred_check
    _
  $region38: #{straight_through_policy_2d.1} parent=0 // pred_check_branch
    %968 = sbr.rel (0) target = $region40
  $region39: #{straight_through_policy_2d.1} parent=0 // pred_region
    _
  $region40: #{straight_through_policy_2d.1} parent=0 // pred_fallthru
    _

</llo_original>
